<compile_context>
chip_gen: v5e
topology: v5e:2x2
jax: 0.10.0
libtpu: 0.0.40
codegen_flags: <defaults>
</compile_context>

<pallas_src>
import functools

import jax
import jax.numpy as jnp
import numpy as np
from jax.experimental import pallas as pl
from jax.experimental.pallas import tpu as pltpu


# ----------------------------------------------------------------------------
# Fused kernel: combined (audio+video) block-diagonal LSTM recurrence + MLP head
# ----------------------------------------------------------------------------
def fused_forward_kernel(ax_ref, vx_ref, p_ref,
                         a_wih_ref, v_wih_ref, b_ref, whh_ref,
                         w1hv_ref, w1p_ref, b1_ref,
                         w2_ref, b2_ref,
                         out_ref,
                         pg_ref,
                         *, seq_len, batch, hidden_dim, compute_dtype):
    H = hidden_dim
    B = batch
    f32 = jnp.float32

    # --- Prologue: hoisted input projection over ALL timesteps, one MXU matmul
    #     per modality, already emitted in the combined gate-major layout
    #     [i_a i_v f_a f_v g_a g_v o_a o_v] (weights pre-permuted host-side).
    #     compute_dtype (bf16) only applies here — recurrence stays f32.
    pg = (jnp.dot(ax_ref[...].astype(compute_dtype),
                  a_wih_ref[...].astype(compute_dtype),
                  preferred_element_type=f32)
          + jnp.dot(vx_ref[...].astype(compute_dtype),
                    v_wih_ref[...].astype(compute_dtype),
                    preferred_element_type=f32)
          + b_ref[...])
    # Park pregates in VMEM scratch; read one timestep slab per step (bounds
    # live ranges when S grows — the unrolled Python loop never keeps the whole
    # pregate tensor live in vregs).
    pg_ref[...] = pg

    whh = whh_ref[...]            # (2H, 8H) f32, block-diag, gate-major columns

    # Loop-invariant lane mask selecting the "g" (cell candidate / tanh) block,
    # which occupies combined lanes [4H, 6H).
    lane = jax.lax.broadcasted_iota(jnp.int32, (B, 8 * H), 1)
    g_mask = (lane >= 4 * H) & (lane < 6 * H)

    h = jnp.zeros((B, 2 * H), f32)   # [h_a | h_v]
    c = jnp.zeros((B, 2 * H), f32)   # [c_a | c_v]

    # --- Fully-unrolled serial recurrence: ONE matmul + ONE tanh pass + ONE
    #     cell update per timestep for both modalities together.
    # TODO(synk): on v7x the two modalities could instead run on the 2
    # TensorCores via pl.core_map(create_tensorcore_mesh); single-core path
    # kept here since v5e/v6e have one TC.
    for t in range(seq_len):
        r0 = t * B
        gates = pg_ref[r0:r0 + B, :] + jnp.dot(h, whh,
                                               preferred_element_type=f32)
        # Single transcendental pass: sigmoid(x) = 0.5 * (1 + tanh(x / 2)).
        pre = jnp.where(g_mask, gates, 0.5 * gates)
        th = jnp.tanh(pre)
        act = jnp.where(g_mask, th, 0.5 * th + 0.5)

        i_g = act[:, 0 * H:2 * H]
        f_g = act[:, 2 * H:4 * H]
        g_g = act[:, 4 * H:6 * H]
        o_g = act[:, 6 * H:8 * H]
        c = f_g * c + i_g * g_g
        h = o_g * jnp.tanh(c)

    # --- Fused MLP head: fc1 -> ReLU -> (dropout = identity, eval) -> fc2.
    #     fc1 audio+video block folded into one (2H, Hm) matmul on the combined
    #     state; personalized features are a second matmul-add (no lane concat).
    x = (jnp.dot(h, w1hv_ref[...], preferred_element_type=f32)
         + jnp.dot(p_ref[...], w1p_ref[...], preferred_element_type=f32)
         + b1_ref[...])
    x = jnp.maximum(x, 0.0)
    out_ref[...] = jnp.dot(x, w2_ref[...], preferred_element_type=f32) + b2_ref[...]


# ----------------------------------------------------------------------------
# One-time weight layout preparation (hoisted out of the per-call path)
# ----------------------------------------------------------------------------
def prepare_params(params, hidden_dim_lstm, num_classes):
    """Build the combined / permuted / padded weights once."""
    f32 = jnp.float32
    H = hidden_dim_lstm
    Da = params["a_w_ih"].shape[1]
    Dv = params["v_w_ih"].shape[1]
    Hm = params["fc1_w"].shape[0]
    C = num_classes
    C_pad = ((C + 127) // 128) * 128      # lane-dense output, sliced in wrapper

    a_wih_t = params["a_w_ih"].T.astype(f32)           # (Da, 4H) cols [i f g o]
    v_wih_t = params["v_w_ih"].T.astype(f32)           # (Dv, 4H)
    a_whh_t = params["a_w_hh"].T.astype(f32)           # (H, 4H)
    v_whh_t = params["v_w_hh"].T.astype(f32)           # (H, 4H)
    a_b = (params["a_b_ih"] + params["a_b_hh"]).astype(f32)   # (4H,)
    v_b = (params["v_b_ih"] + params["v_b_hh"]).astype(f32)

    # Combined gate-major layout: columns [i_a i_v | f_a f_v | g_a g_v | o_a o_v]
    a_wih_c = jnp.zeros((Da, 8 * H), f32)
    v_wih_c = jnp.zeros((Dv, 8 * H), f32)
    w_hh_c = jnp.zeros((2 * H, 8 * H), f32)             # block-diag per modality
    b_c = jnp.zeros((1, 8 * H), f32)
    for k in range(4):                                   # i, f, g, o
        src = slice(k * H, (k + 1) * H)
        dst_a = slice((2 * k) * H, (2 * k + 1) * H)
        dst_v = slice((2 * k + 1) * H, (2 * k + 2) * H)
        a_wih_c = a_wih_c.at[:, dst_a].set(a_wih_t[:, src])
        v_wih_c = v_wih_c.at[:, dst_v].set(v_wih_t[:, src])
        w_hh_c = w_hh_c.at[0:H, dst_a].set(a_whh_t[:, src])
        w_hh_c = w_hh_c.at[H:2 * H, dst_v].set(v_whh_t[:, src])
        b_c = b_c.at[0, dst_a].set(a_b[src])
        b_c = b_c.at[0, dst_v].set(v_b[src])

    w1 = params["fc1_w"].astype(f32)                     # (Hm, 2H + Dp)
    w1_hv = w1[:, :2 * H].T                              # (2H, Hm) — [h_a|h_v]
    w1_p = w1[:, 2 * H:].T                               # (Dp, Hm)
    b1 = params["fc1_b"].astype(f32)[None, :]            # (1, Hm)
    w2_pad = jnp.zeros((Hm, C_pad), f32).at[:, :C].set(params["fc2_w"].T)
    b2_pad = jnp.zeros((1, C_pad), f32).at[:, :C].set(params["fc2_b"])

    return {
        "a_wih_c": a_wih_c, "v_wih_c": v_wih_c, "b_c": b_c, "w_hh_c": w_hh_c,
        "w1_hv": w1_hv, "w1_p": w1_p, "b1": b1,
        "w2_pad": w2_pad, "b2_pad": b2_pad,
        "H": H, "C": C, "C_pad": C_pad,
    }


# ----------------------------------------------------------------------------
# Per-call wrapper: activation layout only + single pallas_call
# ----------------------------------------------------------------------------
def early_fusion_lstm_forward(prep, A_feat, V_feat, P_feat,
                              compute_dtype=jnp.float32):
    if P_feat.ndim == 1:
        P_feat = P_feat[None, :]
    H = prep["H"]
    B, S, Da = A_feat.shape
    Dv = V_feat.shape[2]

    # time-major, flattened: timestep t occupies rows [t*B, (t+1)*B)
    A_x = jnp.transpose(A_feat, (1, 0, 2)).reshape(S * B, Da).astype(jnp.float32)
    V_x = jnp.transpose(V_feat, (1, 0, 2)).reshape(S * B, Dv).astype(jnp.float32)

    kernel = functools.partial(fused_forward_kernel, seq_len=S, batch=B,
                               hidden_dim=H, compute_dtype=compute_dtype)
    vmem = pl.BlockSpec(memory_space=pltpu.MemorySpace.VMEM)

    # TODO(synk): add a batch-tiled grid with pipelined BlockSpecs once the
    # resident footprint approaches ~16-24 MiB (v7x has only 64 MiB VMEM);
    # at these sizes everything co-resides trivially.
    logits_pad = pl.pallas_call(
        kernel,
        out_shape=jax.ShapeDtypeStruct((B, prep["C_pad"]), jnp.float32),
        in_specs=[vmem] * 12,
        out_specs=vmem,
        scratch_shapes=[pltpu.VMEM((S * B, 8 * H), jnp.float32)],
        compiler_params=pltpu.CompilerParams(vmem_limit_bytes=32 * 1024 * 1024),
    )(A_x, V_x, P_feat.astype(jnp.float32),
      prep["a_wih_c"], prep["v_wih_c"], prep["b_c"], prep["w_hh_c"],
      prep["w1_hv"], prep["w1_p"], prep["b1"],
      prep["w2_pad"], prep["b2_pad"])
    return logits_pad[:, :prep["C"]]


# ----------------------------------------------------------------------------
# Parameter construction (mirrors PyTorch module shapes, deterministic)
# ----------------------------------------------------------------------------
def init_params(key, audio_dim, video_dim, pers_dim,
                hidden_dim_lstm, hidden_dim_mlp, num_classes):
    ks = jax.random.split(key, 12)
    H = hidden_dim_lstm
    bound_lstm = 1.0 / np.sqrt(H)

    def u(k, shape, bound):
        return jax.random.uniform(k, shape, jnp.float32, -bound, bound)

    params = {}
    # audio LSTM (PyTorch shapes: w_ih (4H, D), w_hh (4H, H), biases (4H,))
    params["a_w_ih"] = u(ks[0], (4 * H, audio_dim), bound_lstm)
    params["a_w_hh"] = u(ks[1], (4 * H, H), bound_lstm)
    params["a_b_ih"] = u(ks[2], (4 * H,), bound_lstm)
    params["a_b_hh"] = u(ks[3], (4 * H,), bound_lstm)
    # video LSTM
    params["v_w_ih"] = u(ks[4], (4 * H, video_dim), bound_lstm)
    params["v_w_hh"] = u(ks[5], (4 * H, H), bound_lstm)
    params["v_b_ih"] = u(ks[6], (4 * H,), bound_lstm)
    params["v_b_hh"] = u(ks[7], (4 * H,), bound_lstm)
    # fc1 / fc2
    concat_dim = H + H + pers_dim
    b1 = 1.0 / np.sqrt(concat_dim)
    b2 = 1.0 / np.sqrt(hidden_dim_mlp)
    params["fc1_w"] = u(ks[8], (hidden_dim_mlp, concat_dim), b1)
    params["fc1_b"] = u(ks[9], (hidden_dim_mlp,), b1)
    params["fc2_w"] = u(ks[10], (num_classes, hidden_dim_mlp), b2)
    params["fc2_b"] = u(ks[11], (num_classes,), b2)
    return params


# ----------------------------------------------------------------------------
# Pure-JAX reference for validation
# ----------------------------------------------------------------------------
def _lstm_ref(x_bsd, w_ih, w_hh, b_ih, b_hh, H):
    B, S, _ = x_bsd.shape
    h = jnp.zeros((B, H), jnp.float32)
    c = jnp.zeros((B, H), jnp.float32)
    for t in range(S):
        g = x_bsd[:, t, :] @ w_ih.T + b_ih + h @ w_hh.T + b_hh
        i = jax.nn.sigmoid(g[:, 0 * H:1 * H])
        f = jax.nn.sigmoid(g[:, 1 * H:2 * H])
        gg = jnp.tanh(g[:, 2 * H:3 * H])
        o = jax.nn.sigmoid(g[:, 3 * H:4 * H])
        c = f * c + i * gg
        h = o * jnp.tanh(c)
    return h


def _forward_ref(params, A, V, P, H):
    A_last = _lstm_ref(A, params["a_w_ih"], params["a_w_hh"],
                       params["a_b_ih"], params["a_b_hh"], H)
    V_last = _lstm_ref(V, params["v_w_ih"], params["v_w_hh"],
                       params["v_b_ih"], params["v_b_hh"], H)
    fusion = jnp.concatenate([A_last, V_last, P], axis=1)
    x = jnp.maximum(fusion @ params["fc1_w"].T + params["fc1_b"], 0.0)
    return x @ params["fc2_w"].T + params["fc2_b"]


if __name__ == "__main__":
    batch = 2
    seq_len = 8
    audio_dim = 16
    video_dim = 12
    pers_dim = 8
    hidden_dim_lstm = 32
    hidden_dim_mlp = 32
    num_classes = 4

    key = jax.random.PRNGKey(0)
    k_params, k_a, k_v, k_p = jax.random.split(key, 4)

    params = init_params(k_params, audio_dim, video_dim, pers_dim,
                         hidden_dim_lstm, hidden_dim_mlp, num_classes)
    # One-time layout prep (NOT on the per-call path).
    prep = prepare_params(params, hidden_dim_lstm, num_classes)

    A_feat = jax.random.normal(k_a, (batch, seq_len, audio_dim), jnp.float32)
    V_feat = jax.random.normal(k_v, (batch, seq_len, video_dim), jnp.float32)
    P_feat = jax.random.normal(k_p, (batch, pers_dim), jnp.float32)

    # compute_dtype=jnp.float32 for bit-tight validation; jnp.bfloat16 only
    # affects the (off-critical-path) prologue projection on v6e/v7x.
    logits = early_fusion_lstm_forward(prep, A_feat, V_feat, P_feat,
                                       compute_dtype=jnp.float32)
    logits = jax.block_until_ready(logits)

    ref = jax.block_until_ready(
        _forward_ref(params, A_feat, V_feat, P_feat, hidden_dim_lstm))

    assert logits.shape == (batch, num_classes)
    np.testing.assert_allclose(np.asarray(logits), np.asarray(ref),
                               rtol=1e-4, atol=1e-4)
    print("KERNEL_OK")
</pallas_src>

<mosaic_0001>
module attributes {stable_mosaic.version = 11 : i64} {
  func.func @fused_forward_kernel(%arg0: memref<16x16xf32, #tpu.memory_space<vmem>>, %arg1: memref<16x12xf32, #tpu.memory_space<vmem>>, %arg2: memref<2x8xf32, #tpu.memory_space<vmem>>, %arg3: memref<16x256xf32, #tpu.memory_space<vmem>>, %arg4: memref<12x256xf32, #tpu.memory_space<vmem>>, %arg5: memref<1x256xf32, #tpu.memory_space<vmem>>, %arg6: memref<64x256xf32, #tpu.memory_space<vmem>>, %arg7: memref<64x32xf32, #tpu.memory_space<vmem>>, %arg8: memref<8x32xf32, #tpu.memory_space<vmem>>, %arg9: memref<1x32xf32, #tpu.memory_space<vmem>>, %arg10: memref<32x128xf32, #tpu.memory_space<vmem>>, %arg11: memref<1x128xf32, #tpu.memory_space<vmem>>, %arg12: memref<2x128xf32, #tpu.memory_space<vmem>>, %arg13: memref<16x256xf32, #tpu.memory_space<vmem>>) attributes {dimension_semantics = [], scalar_prefetch = 0 : i64, scratch_operands = 1 : i64, tpu.core_type = #tpu.core_type<tc>} {
    %c0 = arith.constant 0 : index
    %c0_0 = arith.constant 0 : index
    %0 = vector.load %arg0[%c0, %c0_0] : memref<16x16xf32, #tpu.memory_space<vmem>>, vector<16x16xf32>
    %c0_1 = arith.constant 0 : index
    %c0_2 = arith.constant 0 : index
    %1 = vector.load %arg3[%c0_1, %c0_2] : memref<16x256xf32, #tpu.memory_space<vmem>>, vector<16x256xf32>
    %cst = arith.constant dense<0.000000e+00> : vector<16x256xf32>
    %2 = tpu.matmul %0, %1, %cst {dimension_numbers = #tpu.dot_dimension_numbers<[1], [0], [0], [1], [0, 0, 1, 1], [], []>} : vector<16x16xf32>, vector<16x256xf32>, vector<16x256xf32> -> vector<16x256xf32>
    %c0_3 = arith.constant 0 : index
    %c0_4 = arith.constant 0 : index
    %3 = vector.load %arg1[%c0_3, %c0_4] : memref<16x12xf32, #tpu.memory_space<vmem>>, vector<16x12xf32>
    %c0_5 = arith.constant 0 : index
    %c0_6 = arith.constant 0 : index
    %4 = vector.load %arg4[%c0_5, %c0_6] : memref<12x256xf32, #tpu.memory_space<vmem>>, vector<12x256xf32>
    %cst_7 = arith.constant dense<0.000000e+00> : vector<16x256xf32>
    %5 = tpu.matmul %3, %4, %cst_7 {dimension_numbers = #tpu.dot_dimension_numbers<[1], [0], [0], [1], [0, 0, 1, 1], [], []>} : vector<16x12xf32>, vector<12x256xf32>, vector<16x256xf32> -> vector<16x256xf32>
    %6 = arith.addf %2, %5 : vector<16x256xf32>
    %c0_8 = arith.constant 0 : index
    %c0_9 = arith.constant 0 : index
    %7 = vector.load %arg5[%c0_8, %c0_9] : memref<1x256xf32, #tpu.memory_space<vmem>>, vector<1x256xf32>
    %8 = vector.broadcast %7 : vector<1x256xf32> to vector<16x256xf32>
    %9 = arith.addf %6, %8 : vector<16x256xf32>
    %c0_10 = arith.constant 0 : index
    %c0_11 = arith.constant 0 : index
    %10 = vector.load %arg13[%c0_10, %c0_11] : memref<16x256xf32, #tpu.memory_space<vmem>>, vector<16x256xf32>
    tpu.vector_store %arg13[%c0_10, %c0_11], %9 {strides = array<i32>} : memref<16x256xf32, #tpu.memory_space<vmem>>, vector<16x256xf32>,
    %c0_12 = arith.constant 0 : index
    %c0_13 = arith.constant 0 : index
    %11 = vector.load %arg6[%c0_12, %c0_13] : memref<64x256xf32, #tpu.memory_space<vmem>>, vector<64x256xf32>
    %12 = tpu.iota {dimensions = array<i32: 1>} : vector<2x256xi32>
    %c128_i32 = arith.constant 128 : i32
    %13 = vector.broadcast %c128_i32 : i32 to vector<2x256xi32>
    %14 = arith.cmpi sge, %12, %13 : vector<2x256xi32>
    %c192_i32 = arith.constant 192 : i32
    %15 = vector.broadcast %c192_i32 : i32 to vector<2x256xi32>
    %16 = arith.cmpi slt, %12, %15 : vector<2x256xi32>
    %17 = arith.andi %14, %16 : vector<2x256xi1>
    %cst_14 = arith.constant 0.000000e+00 : f32
    %18 = vector.broadcast %cst_14 : f32 to vector<2x64xf32>
    %cst_15 = arith.constant 0.000000e+00 : f32
    %19 = vector.broadcast %cst_15 : f32 to vector<2x64xf32>
    %c0_16 = arith.constant 0 : index
    %c0_17 = arith.constant 0 : index
    %20 = vector.load %arg13[%c0_16, %c0_17] : memref<16x256xf32, #tpu.memory_space<vmem>>, vector<2x256xf32>
    %cst_18 = arith.constant dense<0.000000e+00> : vector<2x256xf32>
    %21 = tpu.matmul %18, %11, %cst_18 {dimension_numbers = #tpu.dot_dimension_numbers<[1], [0], [0], [1], [0, 0, 1, 1], [], []>} : vector<2x64xf32>, vector<64x256xf32>, vector<2x256xf32> -> vector<2x256xf32>
    %22 = arith.addf %20, %21 : vector<2x256xf32>
    %cst_19 = arith.constant 5.000000e-01 : f32
    %23 = vector.broadcast %cst_19 : f32 to vector<2x256xf32>
    %24 = arith.mulf %23, %22 : vector<2x256xf32>
    %25 = arith.select %17, %22, %24 : vector<2x256xi1>, vector<2x256xf32>
    %26 = math.tanh %25 : vector<2x256xf32>
    %cst_20 = arith.constant 5.000000e-01 : f32
    %27 = vector.broadcast %cst_20 : f32 to vector<2x256xf32>
    %28 = arith.mulf %27, %26 : vector<2x256xf32>
    %cst_21 = arith.constant 5.000000e-01 : f32
    %29 = vector.broadcast %cst_21 : f32 to vector<2x256xf32>
    %30 = arith.addf %28, %29 : vector<2x256xf32>
    %31 = arith.select %17, %26, %30 : vector<2x256xi1>, vector<2x256xf32>
    %32 = vector.extract_strided_slice %31 {offsets = [0, 0], sizes = [2, 64], strides = [1, 1]} : vector<2x256xf32> to vector<2x64xf32>
    %33 = vector.extract_strided_slice %31 {offsets = [0, 64], sizes = [2, 64], strides = [1, 1]} : vector<2x256xf32> to vector<2x64xf32>
    %34 = vector.extract_strided_slice %31 {offsets = [0, 128], sizes = [2, 64], strides = [1, 1]} : vector<2x256xf32> to vector<2x64xf32>
    %35 = vector.extract_strided_slice %31 {offsets = [0, 192], sizes = [2, 64], strides = [1, 1]} : vector<2x256xf32> to vector<2x64xf32>
    %36 = arith.mulf %33, %19 : vector<2x64xf32>
    %37 = arith.mulf %32, %34 : vector<2x64xf32>
    %38 = arith.addf %36, %37 : vector<2x64xf32>
    %39 = math.tanh %38 : vector<2x64xf32>
    %40 = arith.mulf %35, %39 : vector<2x64xf32>
    %c2 = arith.constant 2 : index
    %c0_22 = arith.constant 0 : index
    %41 = vector.load %arg13[%c2, %c0_22] : memref<16x256xf32, #tpu.memory_space<vmem>>, vector<2x256xf32>
    %cst_23 = arith.constant dense<0.000000e+00> : vector<2x256xf32>
    %42 = tpu.matmul %40, %11, %cst_23 {dimension_numbers = #tpu.dot_dimension_numbers<[1], [0], [0], [1], [0, 0, 1, 1], [], []>} : vector<2x64xf32>, vector<64x256xf32>, vector<2x256xf32> -> vector<2x256xf32>
    %43 = arith.addf %41, %42 : vector<2x256xf32>
    %cst_24 = arith.constant 5.000000e-01 : f32
    %44 = vector.broadcast %cst_24 : f32 to vector<2x256xf32>
    %45 = arith.mulf %44, %43 : vector<2x256xf32>
    %46 = arith.select %17, %43, %45 : vector<2x256xi1>, vector<2x256xf32>
    %47 = math.tanh %46 : vector<2x256xf32>
    %cst_25 = arith.constant 5.000000e-01 : f32
    %48 = vector.broadcast %cst_25 : f32 to vector<2x256xf32>
    %49 = arith.mulf %48, %47 : vector<2x256xf32>
    %cst_26 = arith.constant 5.000000e-01 : f32
    %50 = vector.broadcast %cst_26 : f32 to vector<2x256xf32>
    %51 = arith.addf %49, %50 : vector<2x256xf32>
    %52 = arith.select %17, %47, %51 : vector<2x256xi1>, vector<2x256xf32>
    %53 = vector.extract_strided_slice %52 {offsets = [0, 0], sizes = [2, 64], strides = [1, 1]} : vector<2x256xf32> to vector<2x64xf32>
    %54 = vector.extract_strided_slice %52 {offsets = [0, 64], sizes = [2, 64], strides = [1, 1]} : vector<2x256xf32> to vector<2x64xf32>
    %55 = vector.extract_strided_slice %52 {offsets = [0, 128], sizes = [2, 64], strides = [1, 1]} : vector<2x256xf32> to vector<2x64xf32>
    %56 = vector.extract_strided_slice %52 {offsets = [0, 192], sizes = [2, 64], strides = [1, 1]} : vector<2x256xf32> to vector<2x64xf32>
    %57 = arith.mulf %54, %38 : vector<2x64xf32>
    %58 = arith.mulf %53, %55 : vector<2x64xf32>
    %59 = arith.addf %57, %58 : vector<2x64xf32>
    %60 = math.tanh %59 : vector<2x64xf32>
    %61 = arith.mulf %56, %60 : vector<2x64xf32>
    %c4 = arith.constant 4 : index
    %c0_27 = arith.constant 0 : index
    %62 = vector.load %arg13[%c4, %c0_27] : memref<16x256xf32, #tpu.memory_space<vmem>>, vector<2x256xf32>
    %cst_28 = arith.constant dense<0.000000e+00> : vector<2x256xf32>
    %63 = tpu.matmul %61, %11, %cst_28 {dimension_numbers = #tpu.dot_dimension_numbers<[1], [0], [0], [1], [0, 0, 1, 1], [], []>} : vector<2x64xf32>, vector<64x256xf32>, vector<2x256xf32> -> vector<2x256xf32>
    %64 = arith.addf %62, %63 : vector<2x256xf32>
    %cst_29 = arith.constant 5.000000e-01 : f32
    %65 = vector.broadcast %cst_29 : f32 to vector<2x256xf32>
    %66 = arith.mulf %65, %64 : vector<2x256xf32>
    %67 = arith.select %17, %64, %66 : vector<2x256xi1>, vector<2x256xf32>
    %68 = math.tanh %67 : vector<2x256xf32>
    %cst_30 = arith.constant 5.000000e-01 : f32
    %69 = vector.broadcast %cst_30 : f32 to vector<2x256xf32>
    %70 = arith.mulf %69, %68 : vector<2x256xf32>
    %cst_31 = arith.constant 5.000000e-01 : f32
    %71 = vector.broadcast %cst_31 : f32 to vector<2x256xf32>
    %72 = arith.addf %70, %71 : vector<2x256xf32>
    %73 = arith.select %17, %68, %72 : vector<2x256xi1>, vector<2x256xf32>
    %74 = vector.extract_strided_slice %73 {offsets = [0, 0], sizes = [2, 64], strides = [1, 1]} : vector<2x256xf32> to vector<2x64xf32>
    %75 = vector.extract_strided_slice %73 {offsets = [0, 64], sizes = [2, 64], strides = [1, 1]} : vector<2x256xf32> to vector<2x64xf32>
    %76 = vector.extract_strided_slice %73 {offsets = [0, 128], sizes = [2, 64], strides = [1, 1]} : vector<2x256xf32> to vector<2x64xf32>
    %77 = vector.extract_strided_slice %73 {offsets = [0, 192], sizes = [2, 64], strides = [1, 1]} : vector<2x256xf32> to vector<2x64xf32>
    %78 = arith.mulf %75, %59 : vector<2x64xf32>
    %79 = arith.mulf %74, %76 : vector<2x64xf32>
    %80 = arith.addf %78, %79 : vector<2x64xf32>
    %81 = math.tanh %80 : vector<2x64xf32>
    %82 = arith.mulf %77, %81 : vector<2x64xf32>
    %c6 = arith.constant 6 : index
    %c0_32 = arith.constant 0 : index
    %83 = vector.load %arg13[%c6, %c0_32] : memref<16x256xf32, #tpu.memory_space<vmem>>, vector<2x256xf32>
    %cst_33 = arith.constant dense<0.000000e+00> : vector<2x256xf32>
    %84 = tpu.matmul %82, %11, %cst_33 {dimension_numbers = #tpu.dot_dimension_numbers<[1], [0], [0], [1], [0, 0, 1, 1], [], []>} : vector<2x64xf32>, vector<64x256xf32>, vector<2x256xf32> -> vector<2x256xf32>
    %85 = arith.addf %83, %84 : vector<2x256xf32>
    %cst_34 = arith.constant 5.000000e-01 : f32
    %86 = vector.broadcast %cst_34 : f32 to vector<2x256xf32>
    %87 = arith.mulf %86, %85 : vector<2x256xf32>
    %88 = arith.select %17, %85, %87 : vector<2x256xi1>, vector<2x256xf32>
    %89 = math.tanh %88 : vector<2x256xf32>
    %cst_35 = arith.constant 5.000000e-01 : f32
    %90 = vector.broadcast %cst_35 : f32 to vector<2x256xf32>
    %91 = arith.mulf %90, %89 : vector<2x256xf32>
    %cst_36 = arith.constant 5.000000e-01 : f32
    %92 = vector.broadcast %cst_36 : f32 to vector<2x256xf32>
    %93 = arith.addf %91, %92 : vector<2x256xf32>
    %94 = arith.select %17, %89, %93 : vector<2x256xi1>, vector<2x256xf32>
    %95 = vector.extract_strided_slice %94 {offsets = [0, 0], sizes = [2, 64], strides = [1, 1]} : vector<2x256xf32> to vector<2x64xf32>
    %96 = vector.extract_strided_slice %94 {offsets = [0, 64], sizes = [2, 64], strides = [1, 1]} : vector<2x256xf32> to vector<2x64xf32>
    %97 = vector.extract_strided_slice %94 {offsets = [0, 128], sizes = [2, 64], strides = [1, 1]} : vector<2x256xf32> to vector<2x64xf32>
    %98 = vector.extract_strided_slice %94 {offsets = [0, 192], sizes = [2, 64], strides = [1, 1]} : vector<2x256xf32> to vector<2x64xf32>
    %99 = arith.mulf %96, %80 : vector<2x64xf32>
    %100 = arith.mulf %95, %97 : vector<2x64xf32>
    %101 = arith.addf %99, %100 : vector<2x64xf32>
    %102 = math.tanh %101 : vector<2x64xf32>
    %103 = arith.mulf %98, %102 : vector<2x64xf32>
    %c8 = arith.constant 8 : index
    %c0_37 = arith.constant 0 : index
    %104 = vector.load %arg13[%c8, %c0_37] : memref<16x256xf32, #tpu.memory_space<vmem>>, vector<2x256xf32>
    %cst_38 = arith.constant dense<0.000000e+00> : vector<2x256xf32>
    %105 = tpu.matmul %103, %11, %cst_38 {dimension_numbers = #tpu.dot_dimension_numbers<[1], [0], [0], [1], [0, 0, 1, 1], [], []>} : vector<2x64xf32>, vector<64x256xf32>, vector<2x256xf32> -> vector<2x256xf32>
    %106 = arith.addf %104, %105 : vector<2x256xf32>
    %cst_39 = arith.constant 5.000000e-01 : f32
    %107 = vector.broadcast %cst_39 : f32 to vector<2x256xf32>
    %108 = arith.mulf %107, %106 : vector<2x256xf32>
    %109 = arith.select %17, %106, %108 : vector<2x256xi1>, vector<2x256xf32>
    %110 = math.tanh %109 : vector<2x256xf32>
    %cst_40 = arith.constant 5.000000e-01 : f32
    %111 = vector.broadcast %cst_40 : f32 to vector<2x256xf32>
    %112 = arith.mulf %111, %110 : vector<2x256xf32>
    %cst_41 = arith.constant 5.000000e-01 : f32
    %113 = vector.broadcast %cst_41 : f32 to vector<2x256xf32>
    %114 = arith.addf %112, %113 : vector<2x256xf32>
    %115 = arith.select %17, %110, %114 : vector<2x256xi1>, vector<2x256xf32>
    %116 = vector.extract_strided_slice %115 {offsets = [0, 0], sizes = [2, 64], strides = [1, 1]} : vector<2x256xf32> to vector<2x64xf32>
    %117 = vector.extract_strided_slice %115 {offsets = [0, 64], sizes = [2, 64], strides = [1, 1]} : vector<2x256xf32> to vector<2x64xf32>
    %118 = vector.extract_strided_slice %115 {offsets = [0, 128], sizes = [2, 64], strides = [1, 1]} : vector<2x256xf32> to vector<2x64xf32>
    %119 = vector.extract_strided_slice %115 {offsets = [0, 192], sizes = [2, 64], strides = [1, 1]} : vector<2x256xf32> to vector<2x64xf32>
    %120 = arith.mulf %117, %101 : vector<2x64xf32>
    %121 = arith.mulf %116, %118 : vector<2x64xf32>
    %122 = arith.addf %120, %121 : vector<2x64xf32>
    %123 = math.tanh %122 : vector<2x64xf32>
    %124 = arith.mulf %119, %123 : vector<2x64xf32>
    %c10 = arith.constant 10 : index
    %c0_42 = arith.constant 0 : index
    %125 = vector.load %arg13[%c10, %c0_42] : memref<16x256xf32, #tpu.memory_space<vmem>>, vector<2x256xf32>
    %cst_43 = arith.constant dense<0.000000e+00> : vector<2x256xf32>
    %126 = tpu.matmul %124, %11, %cst_43 {dimension_numbers = #tpu.dot_dimension_numbers<[1], [0], [0], [1], [0, 0, 1, 1], [], []>} : vector<2x64xf32>, vector<64x256xf32>, vector<2x256xf32> -> vector<2x256xf32>
    %127 = arith.addf %125, %126 : vector<2x256xf32>
    %cst_44 = arith.constant 5.000000e-01 : f32
    %128 = vector.broadcast %cst_44 : f32 to vector<2x256xf32>
    %129 = arith.mulf %128, %127 : vector<2x256xf32>
    %130 = arith.select %17, %127, %129 : vector<2x256xi1>, vector<2x256xf32>
    %131 = math.tanh %130 : vector<2x256xf32>
    %cst_45 = arith.constant 5.000000e-01 : f32
    %132 = vector.broadcast %cst_45 : f32 to vector<2x256xf32>
    %133 = arith.mulf %132, %131 : vector<2x256xf32>
    %cst_46 = arith.constant 5.000000e-01 : f32
    %134 = vector.broadcast %cst_46 : f32 to vector<2x256xf32>
    %135 = arith.addf %133, %134 : vector<2x256xf32>
    %136 = arith.select %17, %131, %135 : vector<2x256xi1>, vector<2x256xf32>
    %137 = vector.extract_strided_slice %136 {offsets = [0, 0], sizes = [2, 64], strides = [1, 1]} : vector<2x256xf32> to vector<2x64xf32>
    %138 = vector.extract_strided_slice %136 {offsets = [0, 64], sizes = [2, 64], strides = [1, 1]} : vector<2x256xf32> to vector<2x64xf32>
    %139 = vector.extract_strided_slice %136 {offsets = [0, 128], sizes = [2, 64], strides = [1, 1]} : vector<2x256xf32> to vector<2x64xf32>
    %140 = vector.extract_strided_slice %136 {offsets = [0, 192], sizes = [2, 64], strides = [1, 1]} : vector<2x256xf32> to vector<2x64xf32>
    %141 = arith.mulf %138, %122 : vector<2x64xf32>
    %142 = arith.mulf %137, %139 : vector<2x64xf32>
    %143 = arith.addf %141, %142 : vector<2x64xf32>
    %144 = math.tanh %143 : vector<2x64xf32>
    %145 = arith.mulf %140, %144 : vector<2x64xf32>
    %c12 = arith.constant 12 : index
    %c0_47 = arith.constant 0 : index
    %146 = vector.load %arg13[%c12, %c0_47] : memref<16x256xf32, #tpu.memory_space<vmem>>, vector<2x256xf32>
    %cst_48 = arith.constant dense<0.000000e+00> : vector<2x256xf32>
    %147 = tpu.matmul %145, %11, %cst_48 {dimension_numbers = #tpu.dot_dimension_numbers<[1], [0], [0], [1], [0, 0, 1, 1], [], []>} : vector<2x64xf32>, vector<64x256xf32>, vector<2x256xf32> -> vector<2x256xf32>
    %148 = arith.addf %146, %147 : vector<2x256xf32>
    %cst_49 = arith.constant 5.000000e-01 : f32
    %149 = vector.broadcast %cst_49 : f32 to vector<2x256xf32>
    %150 = arith.mulf %149, %148 : vector<2x256xf32>
    %151 = arith.select %17, %148, %150 : vector<2x256xi1>, vector<2x256xf32>
    %152 = math.tanh %151 : vector<2x256xf32>
    %cst_50 = arith.constant 5.000000e-01 : f32
    %153 = vector.broadcast %cst_50 : f32 to vector<2x256xf32>
    %154 = arith.mulf %153, %152 : vector<2x256xf32>
    %cst_51 = arith.constant 5.000000e-01 : f32
    %155 = vector.broadcast %cst_51 : f32 to vector<2x256xf32>
    %156 = arith.addf %154, %155 : vector<2x256xf32>
    %157 = arith.select %17, %152, %156 : vector<2x256xi1>, vector<2x256xf32>
    %158 = vector.extract_strided_slice %157 {offsets = [0, 0], sizes = [2, 64], strides = [1, 1]} : vector<2x256xf32> to vector<2x64xf32>
    %159 = vector.extract_strided_slice %157 {offsets = [0, 64], sizes = [2, 64], strides = [1, 1]} : vector<2x256xf32> to vector<2x64xf32>
    %160 = vector.extract_strided_slice %157 {offsets = [0, 128], sizes = [2, 64], strides = [1, 1]} : vector<2x256xf32> to vector<2x64xf32>
    %161 = vector.extract_strided_slice %157 {offsets = [0, 192], sizes = [2, 64], strides = [1, 1]} : vector<2x256xf32> to vector<2x64xf32>
    %162 = arith.mulf %159, %143 : vector<2x64xf32>
    %163 = arith.mulf %158, %160 : vector<2x64xf32>
    %164 = arith.addf %162, %163 : vector<2x64xf32>
    %165 = math.tanh %164 : vector<2x64xf32>
    %166 = arith.mulf %161, %165 : vector<2x64xf32>
    %c14 = arith.constant 14 : index
    %c0_52 = arith.constant 0 : index
    %167 = vector.load %arg13[%c14, %c0_52] : memref<16x256xf32, #tpu.memory_space<vmem>>, vector<2x256xf32>
    %cst_53 = arith.constant dense<0.000000e+00> : vector<2x256xf32>
    %168 = tpu.matmul %166, %11, %cst_53 {dimension_numbers = #tpu.dot_dimension_numbers<[1], [0], [0], [1], [0, 0, 1, 1], [], []>} : vector<2x64xf32>, vector<64x256xf32>, vector<2x256xf32> -> vector<2x256xf32>
    %169 = arith.addf %167, %168 : vector<2x256xf32>
    %cst_54 = arith.constant 5.000000e-01 : f32
    %170 = vector.broadcast %cst_54 : f32 to vector<2x256xf32>
    %171 = arith.mulf %170, %169 : vector<2x256xf32>
    %172 = arith.select %17, %169, %171 : vector<2x256xi1>, vector<2x256xf32>
    %173 = math.tanh %172 : vector<2x256xf32>
    %cst_55 = arith.constant 5.000000e-01 : f32
    %174 = vector.broadcast %cst_55 : f32 to vector<2x256xf32>
    %175 = arith.mulf %174, %173 : vector<2x256xf32>
    %cst_56 = arith.constant 5.000000e-01 : f32
    %176 = vector.broadcast %cst_56 : f32 to vector<2x256xf32>
    %177 = arith.addf %175, %176 : vector<2x256xf32>
    %178 = arith.select %17, %173, %177 : vector<2x256xi1>, vector<2x256xf32>
    %179 = vector.extract_strided_slice %178 {offsets = [0, 0], sizes = [2, 64], strides = [1, 1]} : vector<2x256xf32> to vector<2x64xf32>
    %180 = vector.extract_strided_slice %178 {offsets = [0, 64], sizes = [2, 64], strides = [1, 1]} : vector<2x256xf32> to vector<2x64xf32>
    %181 = vector.extract_strided_slice %178 {offsets = [0, 128], sizes = [2, 64], strides = [1, 1]} : vector<2x256xf32> to vector<2x64xf32>
    %182 = vector.extract_strided_slice %178 {offsets = [0, 192], sizes = [2, 64], strides = [1, 1]} : vector<2x256xf32> to vector<2x64xf32>
    %183 = arith.mulf %180, %164 : vector<2x64xf32>
    %184 = arith.mulf %179, %181 : vector<2x64xf32>
    %185 = arith.addf %183, %184 : vector<2x64xf32>
    %186 = math.tanh %185 : vector<2x64xf32>
    %187 = arith.mulf %182, %186 : vector<2x64xf32>
    %c0_57 = arith.constant 0 : index
    %c0_58 = arith.constant 0 : index
    %188 = vector.load %arg7[%c0_57, %c0_58] : memref<64x32xf32, #tpu.memory_space<vmem>>, vector<64x32xf32>
    %cst_59 = arith.constant dense<0.000000e+00> : vector<2x32xf32>
    %189 = tpu.matmul %187, %188, %cst_59 {dimension_numbers = #tpu.dot_dimension_numbers<[1], [0], [0], [1], [0, 0, 1, 1], [], []>} : vector<2x64xf32>, vector<64x32xf32>, vector<2x32xf32> -> vector<2x32xf32>
    %c0_60 = arith.constant 0 : index
    %c0_61 = arith.constant 0 : index
    %190 = vector.load %arg2[%c0_60, %c0_61] : memref<2x8xf32, #tpu.memory_space<vmem>>, vector<2x8xf32>
    %c0_62 = arith.constant 0 : index
    %c0_63 = arith.constant 0 : index
    %191 = vector.load %arg8[%c0_62, %c0_63] : memref<8x32xf32, #tpu.memory_space<vmem>>, vector<8x32xf32>
    %cst_64 = arith.constant dense<0.000000e+00> : vector<2x32xf32>
    %192 = tpu.matmul %190, %191, %cst_64 {dimension_numbers = #tpu.dot_dimension_numbers<[1], [0], [0], [1], [0, 0, 1, 1], [], []>} : vector<2x8xf32>, vector<8x32xf32>, vector<2x32xf32> -> vector<2x32xf32>
    %193 = arith.addf %189, %192 : vector<2x32xf32>
    %c0_65 = arith.constant 0 : index
    %c0_66 = arith.constant 0 : index
    %194 = vector.load %arg9[%c0_65, %c0_66] : memref<1x32xf32, #tpu.memory_space<vmem>>, vector<1x32xf32>
    %195 = vector.broadcast %194 : vector<1x32xf32> to vector<2x32xf32>
    %196 = arith.addf %193, %195 : vector<2x32xf32>
    %cst_67 = arith.constant 0.000000e+00 : f32
    %197 = vector.broadcast %cst_67 : f32 to vector<2x32xf32>
    %198 = arith.maximumf %196, %197 : vector<2x32xf32>
    %c0_68 = arith.constant 0 : index
    %c0_69 = arith.constant 0 : index
    %199 = vector.load %arg10[%c0_68, %c0_69] : memref<32x128xf32, #tpu.memory_space<vmem>>, vector<32x128xf32>
    %cst_70 = arith.constant dense<0.000000e+00> : vector<2x128xf32>
    %200 = tpu.matmul %198, %199, %cst_70 {dimension_numbers = #tpu.dot_dimension_numbers<[1], [0], [0], [1], [0, 0, 1, 1], [], []>} : vector<2x32xf32>, vector<32x128xf32>, vector<2x128xf32> -> vector<2x128xf32>
    %c0_71 = arith.constant 0 : index
    %c0_72 = arith.constant 0 : index
    %201 = vector.load %arg11[%c0_71, %c0_72] : memref<1x128xf32, #tpu.memory_space<vmem>>, vector<1x128xf32>
    %202 = vector.broadcast %201 : vector<1x128xf32> to vector<2x128xf32>
    %203 = arith.addf %200, %202 : vector<2x128xf32>
    %c0_73 = arith.constant 0 : index
    %c0_74 = arith.constant 0 : index
    %204 = vector.load %arg12[%c0_73, %c0_74] : memref<2x128xf32, #tpu.memory_space<vmem>>, vector<2x128xf32>
    tpu.vector_store %arg12[%c0_73, %c0_74], %203 {strides = array<i32>} : memref<2x128xf32, #tpu.memory_space<vmem>>, vector<2x128xf32>,
    return
  }
}

</mosaic_0001>

<llo_original>
// kernel: tpu_custom_call.1
$region0: #{tpu_custom_call.1}
  #allocation0 [shape = 'u32[]', space=smem, size = 0x4, offset = 0x4, fixed_abs, tag = 'smem constant byte address 0x4 - core index']
  #allocation1 [shape = 'u32[72,128]{1,0:T(1,128)}', space=vmem, size = 0x9000, scoped, tag = 'internal scratch']
  #allocation2 [shape = 'f32[16,256]{1,0:T(8,128)}', space=vmem, size = 0x4000, scoped, tag = 'scratch operand']
  %s0 = inlined_call_operand.hbm [shape: f32[16,16], index: 0, kind: input, shape index: {}]
  %s1 = inlined_call_operand.hbm [shape: f32[16,12], index: 1, kind: input, shape index: {}]
  %s2 = inlined_call_operand.hbm [shape: f32[2,8], index: 2, kind: input, shape index: {}]
  %s3 = inlined_call_operand.vmem [shape: f32[16,256], index: 3, kind: input, shape index: {}]
  %s4 = inlined_call_operand.vmem [shape: f32[12,256], index: 4, kind: input, shape index: {}]
  %s5 = inlined_call_operand.vmem [shape: f32[1,256], index: 5, kind: input, shape index: {}]
  %s6 = inlined_call_operand.hbm [shape: f32[64,256], index: 6, kind: input, shape index: {}]
  %s7 = inlined_call_operand.vmem [shape: f32[64,32], index: 7, kind: input, shape index: {}]
  %s8 = inlined_call_operand.hbm [shape: f32[8,32], index: 8, kind: input, shape index: {}]
  %s9 = inlined_call_operand.vmem [shape: f32[1,32], index: 9, kind: input, shape index: {}]
  %s10 = inlined_call_operand.vmem [shape: f32[32,128], index: 10, kind: input, shape index: {}]
  %s11 = inlined_call_operand.vmem [shape: f32[1,128], index: 11, kind: input, shape index: {}]
  %s12 = inlined_call_operand.hbm [shape: f32[2,128], index: 12, kind: output, shape index: {}]
  %s13 = sld [smem:[#allocation0]]
  $region78: #{tpu_custom_call.1} parent=0
    _
  %s15 = ssub.s32 1, %s13
  %s16 = scalar_select 0, %s15, %s13
  $region1: #{tpu_custom_call.1} parent=0
    #allocation3 [shape = 'u8[8192]{0}', space=vmem, size = 0x2000, scoped, tag = 'input window, operand 0, single buffered']
    #allocation4 [shape = 's32[1]{0}', space=sflag, size = 0x4, scoped, tag = 'scoped memory for tpu_custom_call.1']
    #allocation5 [shape = 's32[1]{0}', space=sflag, size = 0x4, scoped, tag = 'scoped memory for tpu_custom_call.1']
    #allocation6 [shape = 'u8[8192]{0}', space=vmem, size = 0x2000, scoped, tag = 'input window, operand 1, single buffered']
    #allocation7 [shape = 's32[1]{0}', space=sflag, size = 0x4, scoped, tag = 'scoped memory for tpu_custom_call.1']
    #allocation8 [shape = 'u8[1024]{0}', space=vmem, size = 0x400, scoped, tag = 'input window, operand 2, single buffered']
    #allocation9 [shape = 'u8[65536]{0}', space=vmem, size = 0x10000, scoped, tag = 'input window, operand 6, single buffered']
    #allocation10 [shape = 's32[1]{0}', space=sflag, size = 0x4, scoped, tag = 'scoped memory for tpu_custom_call.1']
    #allocation11 [shape = 'u8[4096]{0}', space=vmem, size = 0x1000, scoped, tag = 'input window, operand 8, single buffered']
    #allocation12 [shape = 'u8[1024]{0}', space=vmem, size = 0x400, scoped, tag = 'output window, operand 0, single buffered']
    %17 = vsyncpa [#allocation4], 0
    %18 = vsyncpa [#allocation7], 0
    %19 = vsyncpa [#allocation10], 0
    %20 = vsyncpa [#allocation5], 0
    // Predicated region
    $region2: #{tpu_custom_call.1} parent=1 // pred_check
      _
    $region3: #{tpu_custom_call.1} parent=1 // pred_check_branch
      %22 = sbr.rel (0) target = $region5
    $region4: #{tpu_custom_call.1} parent=1 // pred_region
      %24 = vsyncadd [#allocation4], 0
      %s25 = sshll.u32 %s0, 4
      %s26 = int_to_ptr.hbm [resolvable:$true] %s25
      %s27 = sshll.u32 [#allocation3], 4
      %s28 = int_to_ptr.vmem [resolvable:$true] %s27
      %33 = dma.hbm_to_vmem [thread:$0]  %s26, 256, %s28, [#allocation4], 128, 128, 8
    $region5: #{tpu_custom_call.1} parent=1 // pred_fallthru
      _
    // Predicated region
    $region6: #{tpu_custom_call.1} parent=1 // pred_check
      _
    $region7: #{tpu_custom_call.1} parent=1 // pred_check_branch
      %35 = sbr.rel (0) target = $region9
    $region8: #{tpu_custom_call.1} parent=1 // pred_region
      %37 = vsyncadd [#allocation7], 0
      %s38 = sshll.u32 %s1, 4
      %s39 = int_to_ptr.hbm [resolvable:$true] %s38
      %s40 = sshll.u32 [#allocation6], 4
      %s41 = int_to_ptr.vmem [resolvable:$true] %s40
      %46 = dma.hbm_to_vmem [thread:$0]  %s39, 256, %s41, [#allocation7], 128, 128, 8
    $region9: #{tpu_custom_call.1} parent=1 // pred_fallthru
      _
    // Predicated region
    $region10: #{tpu_custom_call.1} parent=1 // pred_check
      _
    $region11: #{tpu_custom_call.1} parent=1 // pred_check_branch
      %48 = sbr.rel (0) target = $region13
    $region12: #{tpu_custom_call.1} parent=1 // pred_region
      %50 = vsyncadd [#allocation7], 0
      %s52 = sshll.u32 %s2, 4
      %s53 = int_to_ptr.hbm [resolvable:$true] %s52
      %s54 = sshll.u32 [#allocation8], 4
      %s55 = int_to_ptr.vmem [resolvable:$true] %s54
      %57 = dma.hbm_to_vmem [thread:$0]  %s53, 32, %s55, [#allocation7]
    $region13: #{tpu_custom_call.1} parent=1 // pred_fallthru
      _
    // Predicated region
    $region14: #{tpu_custom_call.1} parent=1 // pred_check
      _
    $region15: #{tpu_custom_call.1} parent=1 // pred_check_branch
      %59 = sbr.rel (0) target = $region17
    $region16: #{tpu_custom_call.1} parent=1 // pred_region
      _
    $region17: #{tpu_custom_call.1} parent=1 // pred_fallthru
      _
    // Predicated region
    $region18: #{tpu_custom_call.1} parent=1 // pred_check
      _
    $region19: #{tpu_custom_call.1} parent=1 // pred_check_branch
      %61 = sbr.rel (0) target = $region21
    $region20: #{tpu_custom_call.1} parent=1 // pred_region
      _
    $region21: #{tpu_custom_call.1} parent=1 // pred_fallthru
      _
    // Predicated region
    $region22: #{tpu_custom_call.1} parent=1 // pred_check
      _
    $region23: #{tpu_custom_call.1} parent=1 // pred_check_branch
      %63 = sbr.rel (0) target = $region25
    $region24: #{tpu_custom_call.1} parent=1 // pred_region
      _
    $region25: #{tpu_custom_call.1} parent=1 // pred_fallthru
      _
    // Predicated region
    $region26: #{tpu_custom_call.1} parent=1 // pred_check
      _
    $region27: #{tpu_custom_call.1} parent=1 // pred_check_branch
      %65 = sbr.rel (0) target = $region29
    $region28: #{tpu_custom_call.1} parent=1 // pred_region
      %67 = vsyncadd [#allocation10], 0
      %s68 = sshll.u32 %s6, 4
      %s69 = int_to_ptr.hbm [resolvable:$true] %s68
      %s70 = sshll.u32 [#allocation9], 4
      %s71 = int_to_ptr.vmem [resolvable:$true] %s70
      %76 = dma.hbm_to_vmem [thread:$0]  %s69, 2048, %s71, [#allocation10], 256, 256, 16
    $region29: #{tpu_custom_call.1} parent=1 // pred_fallthru
      _
    // Predicated region
    $region30: #{tpu_custom_call.1} parent=1 // pred_check
      _
    $region31: #{tpu_custom_call.1} parent=1 // pred_check_branch
      %78 = sbr.rel (0) target = $region33
    $region32: #{tpu_custom_call.1} parent=1 // pred_region
      _
    $region33: #{tpu_custom_call.1} parent=1 // pred_fallthru
      _
    // Predicated region
    $region34: #{tpu_custom_call.1} parent=1 // pred_check
      _
    $region35: #{tpu_custom_call.1} parent=1 // pred_check_branch
      %80 = sbr.rel (0) target = $region37
    $region36: #{tpu_custom_call.1} parent=1 // pred_region
      %82 = vsyncadd [#allocation10], 0
      %s84 = sshll.u32 %s8, 4
      %s85 = int_to_ptr.hbm [resolvable:$true] %s84
      %s86 = sshll.u32 [#allocation11], 4
      %s87 = int_to_ptr.vmem [resolvable:$true] %s86
      %89 = dma.hbm_to_vmem [thread:$0]  %s85, 128, %s87, [#allocation10]
    $region37: #{tpu_custom_call.1} parent=1 // pred_fallthru
      _
    // Predicated region
    $region38: #{tpu_custom_call.1} parent=1 // pred_check
      _
    $region39: #{tpu_custom_call.1} parent=1 // pred_check_branch
      %91 = sbr.rel (0) target = $region41
    $region40: #{tpu_custom_call.1} parent=1 // pred_region
      _
    $region41: #{tpu_custom_call.1} parent=1 // pred_fallthru
      _
    // Predicated region
    $region42: #{tpu_custom_call.1} parent=1 // pred_check
      _
    $region43: #{tpu_custom_call.1} parent=1 // pred_check_branch
      %93 = sbr.rel (0) target = $region45
    $region44: #{tpu_custom_call.1} parent=1 // pred_region
      _
    $region45: #{tpu_custom_call.1} parent=1 // pred_fallthru
      _
    // Predicated region
    $region46: #{tpu_custom_call.1} parent=1 // pred_check
      _
    $region47: #{tpu_custom_call.1} parent=1 // pred_check_branch
      %95 = sbr.rel (0) target = $region49
    $region48: #{tpu_custom_call.1} parent=1 // pred_region
      _
    $region49: #{tpu_custom_call.1} parent=1 // pred_fallthru
      _
    // Predicated region
    $region50: #{tpu_custom_call.1} parent=1 // pred_check
      _
    $region51: #{tpu_custom_call.1} parent=1 // pred_check_branch
      %97 = sbr.rel (0) target = $region53
    $region52: #{tpu_custom_call.1} parent=1 // pred_region
      %99 = dma.done [#allocation4], 256
    $region53: #{tpu_custom_call.1} parent=1 // pred_fallthru
      _
    // Predicated region
    $region54: #{tpu_custom_call.1} parent=1 // pred_check
      _
    $region55: #{tpu_custom_call.1} parent=1 // pred_check_branch
      %101 = sbr.rel (0) target = $region57
    $region56: #{tpu_custom_call.1} parent=1 // pred_region
      %103 = dma.done [#allocation7], 256
    $region57: #{tpu_custom_call.1} parent=1 // pred_fallthru
      _
    // Predicated region
    $region58: #{tpu_custom_call.1} parent=1 // pred_check
      _
    $region59: #{tpu_custom_call.1} parent=1 // pred_check_branch
      %105 = sbr.rel (0) target = $region61
    $region60: #{tpu_custom_call.1} parent=1 // pred_region
      %107 = dma.done [#allocation7], 32
    $region61: #{tpu_custom_call.1} parent=1 // pred_fallthru
      _
    // Predicated region
    $region62: #{tpu_custom_call.1} parent=1 // pred_check
      _
    $region63: #{tpu_custom_call.1} parent=1 // pred_check_branch
      %109 = sbr.rel (0) target = $region65
    $region64: #{tpu_custom_call.1} parent=1 // pred_region
      %111 = dma.done [#allocation10], 2048
    $region65: #{tpu_custom_call.1} parent=1 // pred_fallthru
      _
    // Predicated region
    $region66: #{tpu_custom_call.1} parent=1 // pred_check
      _
    $region67: #{tpu_custom_call.1} parent=1 // pred_check_branch
      %113 = sbr.rel (0) target = $region69
    $region68: #{tpu_custom_call.1} parent=1 // pred_region
      %115 = dma.done [#allocation10], 128
    $region69: #{tpu_custom_call.1} parent=1 // pred_fallthru
      _
    %v116 = vld [vmem:[#allocation3] sm:$0xff]
    %v117 = vld [vmem:[#allocation3 + $0x8] sm:$0xff]
    %v118 = vld [vmem:[%s3] sm:$0xff]
    %v119 = vld [vmem:[%s3 + $0x8] sm:$0xff]
    %v120 = vld [vmem:[%s3 + $0x10] sm:$0xff]
    %v121 = vld [vmem:[%s3 + $0x18] sm:$0xff]
    %v122 = vld [vmem:[#allocation6] sm:$0xff]
    %v123 = vld [vmem:[#allocation6 + $0x8] sm:$0xff]
    %v124 = vld [vmem:[%s4] sm:$0xff]
    %v125 = vld [vmem:[%s4 + $0x8] sm:$0xff]
    %v126 = vld [vmem:[%s4 + $0x10] sm:$0xf]
    %v127 = vld [vmem:[%s4 + $0x18] sm:$0xf]
    %vm128 = vcmask 97280
    %v130 = vsel %vm128, %v122, 0
    %v133 = vsel %vm128, %v123, 0
    %vm135 = vcmask 1043456
    %v137 = vsel %vm135, %v126, 0
    %v140 = vsel %vm135, %v127, 0
    %142 = vmatpush.msra.mxu0 0.0
    %143 = vmatpush.msra.mxu0 0.0
    %144 = vmatpush.msra.mxu0 0.0
    %145 = vmatpush.msra.mxu0 0.0
    %146 = vmatpush.msra.mxu0 0.0
    %147 = vmatpush.msra.mxu0 0.0
    %148 = vmatpush.msra.mxu0 0.0
    %149 = vmatpush.msra.mxu0 0.0
    %150 = vmatpush.msra.mxu0 0.0
    %151 = vmatpush.msra.mxu0 0.0
    %152 = vmatpush.msra.mxu0 0.0
    %153 = vmatpush.msra.mxu0 0.0
    %154 = vmatpush.msra.mxu0 0.0
    %155 = vmatpush.msra.mxu0 0.0
    %156 = vmatpush.msra.mxu0 %v137
    %157 = vmatpush.msra.mxu0 %v124
    %158 = vmatmul.f32.gmra.mxu0 %v130
    %v159 = vpop.f32.mrf.mxu0
    %v160 = vadd.f32 0.0, %v159
    %161 = vmatmul.f32.gmra.mxu0 %v133
    %v162 = vpop.f32.mrf.mxu0
    %v163 = vadd.f32 0.0, %v162
    %164 = vdwg.mxu0
    %165 = vmatpush.msra.mxu0 0.0
    %166 = vmatpush.msra.mxu0 0.0
    %167 = vmatpush.msra.mxu0 0.0
    %168 = vmatpush.msra.mxu0 0.0
    %169 = vmatpush.msra.mxu0 0.0
    %170 = vmatpush.msra.mxu0 0.0
    %171 = vmatpush.msra.mxu0 0.0
    %172 = vmatpush.msra.mxu0 0.0
    %173 = vmatpush.msra.mxu0 0.0
    %174 = vmatpush.msra.mxu0 0.0
    %175 = vmatpush.msra.mxu0 0.0
    %176 = vmatpush.msra.mxu0 0.0
    %177 = vmatpush.msra.mxu0 0.0
    %178 = vmatpush.msra.mxu0 0.0
    %179 = vmatpush.msra.mxu0 %v140
    %180 = vmatpush.msra.mxu0 %v125
    %181 = vmatmul.f32.gmra.mxu0 %v130
    %v182 = vpop.f32.mrf.mxu0
    %v183 = vadd.f32 0.0, %v182
    %184 = vmatmul.f32.gmra.mxu0 %v133
    %v185 = vpop.f32.mrf.mxu0
    %v186 = vadd.f32 0.0, %v185
    %187 = vdwg.mxu0
    %vm188 = vcmask 130048
    %v190 = vsel %vm188, %v116, 0
    %v193 = vsel %vm188, %v117, 0
    %195 = vmatpush.msra.mxu0 0.0
    %196 = vmatpush.msra.mxu0 0.0
    %197 = vmatpush.msra.mxu0 0.0
    %198 = vmatpush.msra.mxu0 0.0
    %199 = vmatpush.msra.mxu0 0.0
    %200 = vmatpush.msra.mxu0 0.0
    %201 = vmatpush.msra.mxu0 0.0
    %202 = vmatpush.msra.mxu0 0.0
    %203 = vmatpush.msra.mxu0 0.0
    %204 = vmatpush.msra.mxu0 0.0
    %205 = vmatpush.msra.mxu0 0.0
    %206 = vmatpush.msra.mxu0 0.0
    %207 = vmatpush.msra.mxu0 0.0
    %208 = vmatpush.msra.mxu0 0.0
    %209 = vmatpush.msra.mxu0 %v120
    %210 = vmatpush.msra.mxu0 %v118
    %211 = vmatmul.f32.gmra.mxu0 %v190
    %v212 = vpop.f32.mrf.mxu0
    %v213 = vadd.f32 %v160, %v212
    %214 = vmatmul.f32.gmra.mxu0 %v193
    %v215 = vpop.f32.mrf.mxu0
    %v216 = vadd.f32 %v163, %v215
    %217 = vdwg.mxu0
    %218 = vmatpush.msra.mxu0 0.0
    %219 = vmatpush.msra.mxu0 0.0
    %220 = vmatpush.msra.mxu0 0.0
    %221 = vmatpush.msra.mxu0 0.0
    %222 = vmatpush.msra.mxu0 0.0
    %223 = vmatpush.msra.mxu0 0.0
    %224 = vmatpush.msra.mxu0 0.0
    %225 = vmatpush.msra.mxu0 0.0
    %226 = vmatpush.msra.mxu0 0.0
    %227 = vmatpush.msra.mxu0 0.0
    %228 = vmatpush.msra.mxu0 0.0
    %229 = vmatpush.msra.mxu0 0.0
    %230 = vmatpush.msra.mxu0 0.0
    %231 = vmatpush.msra.mxu0 0.0
    %232 = vmatpush.msra.mxu0 %v121
    %233 = vmatpush.msra.mxu0 %v119
    %234 = vmatmul.f32.gmra.mxu0 %v190
    %v235 = vpop.f32.mrf.mxu0
    %v236 = vadd.f32 %v183, %v235
    %237 = vmatmul.f32.gmra.mxu0 %v193
    %v238 = vpop.f32.mrf.mxu0
    %v239 = vadd.f32 %v186, %v238
    %240 = vdwg.mxu0
    %v241 = vld [vmem:[%s5] sm:$0x3]
    %v243 = vperm.slane %v241, 0
    %v244 = vperm.slane %v241, 1
    %v247 = vadd.f32 %v213, %v243
    %v248 = vadd.f32 %v236, %v244
    %v249 = vadd.f32 %v216, %v243
    %v250 = vadd.f32 %v239, %v244
    %251 = vst [vmem:[#allocation2] sm:$0xff] %v247
    %252 = vst [vmem:[#allocation2 + $0x8] sm:$0xff] %v248
    %253 = vst [vmem:[#allocation2 + $0x10] sm:$0xff] %v249
    %254 = vst [vmem:[#allocation2 + $0x18] sm:$0xff] %v250
    %v255 = vld [vmem:[#allocation9] sm:$0xff]
    %v256 = vld [vmem:[#allocation9 + $0x8] sm:$0xff]
    %v257 = vld [vmem:[#allocation9 + $0x10] sm:$0xff]
    %v258 = vld [vmem:[#allocation9 + $0x18] sm:$0xff]
    %v259 = vld [vmem:[#allocation9 + $0x20] sm:$0xff]
    %v260 = vld [vmem:[#allocation9 + $0x28] sm:$0xff]
    %v261 = vld [vmem:[#allocation9 + $0x30] sm:$0xff]
    %v262 = vld [vmem:[#allocation9 + $0x38] sm:$0xff]
    %v263 = vld [vmem:[#allocation9 + $0x40] sm:$0xff]
    %v264 = vld [vmem:[#allocation9 + $0x48] sm:$0xff]
    %v265 = vld [vmem:[#allocation9 + $0x50] sm:$0xff]
    %v266 = vld [vmem:[#allocation9 + $0x58] sm:$0xff]
    %v267 = vld [vmem:[#allocation9 + $0x60] sm:$0xff]
    %v268 = vld [vmem:[#allocation9 + $0x68] sm:$0xff]
    %v269 = vld [vmem:[#allocation9 + $0x70] sm:$0xff]
    %v270 = vld [vmem:[#allocation9 + $0x78] sm:$0xff]
    %v271 = vlaneseq
    %v272 = vand.u32 %v271, 127
    %v273 = vadd.s32 %v272, 128
    %vm274 = vcmp.ge.s32.totalorder %v272, 128
    %vm275 = vcmp.ge.s32.totalorder %v273, 128
    %vm276 = vcmp.lt.s32.totalorder %v272, 192
    %vm277 = vcmp.lt.s32.totalorder %v273, 192
    %vm278 = vmand %vm274, %vm276
    %vm279 = vmand %vm275, %vm277
    %v280 = vld [vmem:[#allocation2] sm:$0x3]
    %v281 = vld [vmem:[#allocation2 + $0x8] sm:$0x3]
    %vm282 = vcmask 523264
    %v284 = vsel %vm282, 0.0, 0
    %286 = vmatpush.msra.mxu0 0.0
    %287 = vmatpush.msra.mxu0 0.0
    %288 = vmatpush.msra.mxu0 0.0
    %289 = vmatpush.msra.mxu0 0.0
    %290 = vmatpush.msra.mxu0 0.0
    %291 = vmatpush.msra.mxu0 0.0
    %292 = vmatpush.msra.mxu0 0.0
    %293 = vmatpush.msra.mxu0 0.0
    %294 = vmatpush.msra.mxu0 %v269
    %295 = vmatpush.msra.mxu0 %v267
    %296 = vmatpush.msra.mxu0 %v265
    %297 = vmatpush.msra.mxu0 %v263
    %298 = vmatpush.msra.mxu0 %v261
    %299 = vmatpush.msra.mxu0 %v259
    %300 = vmatpush.msra.mxu0 %v257
    %301 = vmatpush.msra.mxu0 %v255
    %302 = vmatmul.f32.gmra.mxu0 %v284
    %v303 = vpop.f32.mrf.mxu0
    %v304 = vadd.f32 0.0, %v303
    %305 = vdwg.mxu0
    %306 = vmatpush.msra.mxu0 0.0
    %307 = vmatpush.msra.mxu0 0.0
    %308 = vmatpush.msra.mxu0 0.0
    %309 = vmatpush.msra.mxu0 0.0
    %310 = vmatpush.msra.mxu0 0.0
    %311 = vmatpush.msra.mxu0 0.0
    %312 = vmatpush.msra.mxu0 0.0
    %313 = vmatpush.msra.mxu0 0.0
    %314 = vmatpush.msra.mxu0 %v270
    %315 = vmatpush.msra.mxu0 %v268
    %316 = vmatpush.msra.mxu0 %v266
    %317 = vmatpush.msra.mxu0 %v264
    %318 = vmatpush.msra.mxu0 %v262
    %319 = vmatpush.msra.mxu0 %v260
    %320 = vmatpush.msra.mxu0 %v258
    %321 = vmatpush.msra.mxu0 %v256
    %322 = vmatmul.f32.gmra.mxu0 %v284
    %v323 = vpop.f32.mrf.mxu0
    %v324 = vadd.f32 0.0, %v323
    %325 = vdwg.mxu0
    %v326 = vadd.f32 %v280, %v304
    %v327 = vadd.f32 %v281, %v324
    %v328 = vmul.f32 %v326, 0.5
    %v329 = vmul.f32 %v327, 0.5
    %v330 = vsel %vm278, %v326, %v328
    %v331 = vsel %vm279, %v327, %v329
    %v332 = vtanh.pop %v330
    %v333 = vtanh.pop %v331
    %v334 = vmul.f32 %v332, 0.5
    %v335 = vmul.f32 %v333, 0.5
    %v336 = vadd.f32 %v334, 0.5
    %v337 = vadd.f32 %v335, 0.5
    %v338 = vsel %vm278, %v332, %v336
    %v339 = vsel %vm279, %v333, %v337
    %v340 = vmul.f32 %v338, 0.0
    %v341 = vmul.f32 %v338, %v339
    %343 = vrot.lane.b32.xlu0 %v341, 64
    %v344 = vpop.permute.xlu0 %343
    %v346 = vadd.f32 %v340, %v344
    %v347 = vtanh.pop %v346
    %v348 = vmul.f32 %v339, %v347
    %v349 = vld [vmem:[#allocation2] sm:$0xc]
    %v350 = vld [vmem:[#allocation2 + $0x8] sm:$0xc]
    %352 = vrot.lane.b32.xlu0 %v348, 64
    %v353 = vpop.permute.xlu0 %352
    %v354 = vsel %vm282, %v353, 0
    %356 = vmatpush.msra.mxu0 0.0
    %357 = vmatpush.msra.mxu0 0.0
    %358 = vmatpush.msra.mxu0 0.0
    %359 = vmatpush.msra.mxu0 0.0
    %360 = vmatpush.msra.mxu0 0.0
    %361 = vmatpush.msra.mxu0 0.0
    %362 = vmatpush.msra.mxu0 0.0
    %363 = vmatpush.msra.mxu0 0.0
    %364 = vmatpush.msra.mxu0 %v269
    %365 = vmatpush.msra.mxu0 %v267
    %366 = vmatpush.msra.mxu0 %v265
    %367 = vmatpush.msra.mxu0 %v263
    %368 = vmatpush.msra.mxu0 %v261
    %369 = vmatpush.msra.mxu0 %v259
    %370 = vmatpush.msra.mxu0 %v257
    %371 = vmatpush.msra.mxu0 %v255
    %372 = vmatmul.f32.gmra.mxu0 %v354
    %v373 = vpop.f32.mrf.mxu0
    %v374 = vadd.f32 0.0, %v373
    %375 = vdwg.mxu0
    %376 = vmatpush.msra.mxu0 0.0
    %377 = vmatpush.msra.mxu0 0.0
    %378 = vmatpush.msra.mxu0 0.0
    %379 = vmatpush.msra.mxu0 0.0
    %380 = vmatpush.msra.mxu0 0.0
    %381 = vmatpush.msra.mxu0 0.0
    %382 = vmatpush.msra.mxu0 0.0
    %383 = vmatpush.msra.mxu0 0.0
    %384 = vmatpush.msra.mxu0 %v270
    %385 = vmatpush.msra.mxu0 %v268
    %386 = vmatpush.msra.mxu0 %v266
    %387 = vmatpush.msra.mxu0 %v264
    %388 = vmatpush.msra.mxu0 %v262
    %389 = vmatpush.msra.mxu0 %v260
    %390 = vmatpush.msra.mxu0 %v258
    %391 = vmatpush.msra.mxu0 %v256
    %392 = vmatmul.f32.gmra.mxu0 %v354
    %v393 = vpop.f32.mrf.mxu0
    %v394 = vadd.f32 0.0, %v393
    %395 = vdwg.mxu0
    %v398 = vrot.slane %v374, 6
    %v399 = vrot.slane %v394, 6
    %v402 = vadd.f32 %v349, %v398
    %v403 = vadd.f32 %v350, %v399
    %v404 = vmul.f32 %v402, 0.5
    %v405 = vmul.f32 %v403, 0.5
    %v406 = vsel %vm278, %v402, %v404
    %v407 = vsel %vm279, %v403, %v405
    %v408 = vtanh.pop %v406
    %v409 = vtanh.pop %v407
    %v410 = vmul.f32 %v408, 0.5
    %v411 = vmul.f32 %v409, 0.5
    %v412 = vadd.f32 %v410, 0.5
    %v413 = vadd.f32 %v411, 0.5
    %v414 = vsel %vm278, %v408, %v412
    %v415 = vsel %vm279, %v409, %v413
    %v417 = vrot.slane %v346, 6
    %v419 = vmul.f32 %v414, %v417
    %v420 = vmul.f32 %v414, %v415
    %422 = vrot.lane.b32.xlu0 %v420, 64
    %v423 = vpop.permute.xlu0 %422
    %v425 = vadd.f32 %v419, %v423
    %v426 = vtanh.pop %v425
    %v427 = vmul.f32 %v415, %v426
    %v428 = vld [vmem:[#allocation2] sm:$0x30]
    %v429 = vld [vmem:[#allocation2 + $0x8] sm:$0x30]
    %v431 = vrot.slane %v427, 2
    %432 = vrot.lane.b32.xlu0 %v431, 64
    %v433 = vpop.permute.xlu0 %432
    %v434 = vsel %vm282, %v433, 0
    %436 = vmatpush.msra.mxu0 0.0
    %437 = vmatpush.msra.mxu0 0.0
    %438 = vmatpush.msra.mxu0 0.0
    %439 = vmatpush.msra.mxu0 0.0
    %440 = vmatpush.msra.mxu0 0.0
    %441 = vmatpush.msra.mxu0 0.0
    %442 = vmatpush.msra.mxu0 0.0
    %443 = vmatpush.msra.mxu0 0.0
    %444 = vmatpush.msra.mxu0 %v269
    %445 = vmatpush.msra.mxu0 %v267
    %446 = vmatpush.msra.mxu0 %v265
    %447 = vmatpush.msra.mxu0 %v263
    %448 = vmatpush.msra.mxu0 %v261
    %449 = vmatpush.msra.mxu0 %v259
    %450 = vmatpush.msra.mxu0 %v257
    %451 = vmatpush.msra.mxu0 %v255
    %452 = vmatmul.f32.gmra.mxu0 %v434
    %v453 = vpop.f32.mrf.mxu0
    %v454 = vadd.f32 0.0, %v453
    %455 = vdwg.mxu0
    %456 = vmatpush.msra.mxu0 0.0
    %457 = vmatpush.msra.mxu0 0.0
    %458 = vmatpush.msra.mxu0 0.0
    %459 = vmatpush.msra.mxu0 0.0
    %460 = vmatpush.msra.mxu0 0.0
    %461 = vmatpush.msra.mxu0 0.0
    %462 = vmatpush.msra.mxu0 0.0
    %463 = vmatpush.msra.mxu0 0.0
    %464 = vmatpush.msra.mxu0 %v270
    %465 = vmatpush.msra.mxu0 %v268
    %466 = vmatpush.msra.mxu0 %v266
    %467 = vmatpush.msra.mxu0 %v264
    %468 = vmatpush.msra.mxu0 %v262
    %469 = vmatpush.msra.mxu0 %v260
    %470 = vmatpush.msra.mxu0 %v258
    %471 = vmatpush.msra.mxu0 %v256
    %472 = vmatmul.f32.gmra.mxu0 %v434
    %v473 = vpop.f32.mrf.mxu0
    %v474 = vadd.f32 0.0, %v473
    %475 = vdwg.mxu0
    %v478 = vrot.slane %v454, 4
    %v479 = vrot.slane %v474, 4
    %v482 = vadd.f32 %v428, %v478
    %v483 = vadd.f32 %v429, %v479
    %v484 = vmul.f32 %v482, 0.5
    %v485 = vmul.f32 %v483, 0.5
    %v486 = vsel %vm278, %v482, %v484
    %v487 = vsel %vm279, %v483, %v485
    %v488 = vtanh.pop %v486
    %v489 = vtanh.pop %v487
    %v490 = vmul.f32 %v488, 0.5
    %v491 = vmul.f32 %v489, 0.5
    %v492 = vadd.f32 %v490, 0.5
    %v493 = vadd.f32 %v491, 0.5
    %v494 = vsel %vm278, %v488, %v492
    %v495 = vsel %vm279, %v489, %v493
    %v497 = vrot.slane %v425, 6
    %v499 = vmul.f32 %v494, %v497
    %v500 = vmul.f32 %v494, %v495
    %502 = vrot.lane.b32.xlu0 %v500, 64
    %v503 = vpop.permute.xlu0 %502
    %v505 = vadd.f32 %v499, %v503
    %v506 = vtanh.pop %v505
    %v507 = vmul.f32 %v495, %v506
    %v508 = vld [vmem:[#allocation2] sm:$0xc0]
    %v509 = vld [vmem:[#allocation2 + $0x8] sm:$0xc0]
    %v511 = vrot.slane %v507, 4
    %512 = vrot.lane.b32.xlu0 %v511, 64
    %v513 = vpop.permute.xlu0 %512
    %v514 = vsel %vm282, %v513, 0
    %516 = vmatpush.msra.mxu0 0.0
    %517 = vmatpush.msra.mxu0 0.0
    %518 = vmatpush.msra.mxu0 0.0
    %519 = vmatpush.msra.mxu0 0.0
    %520 = vmatpush.msra.mxu0 0.0
    %521 = vmatpush.msra.mxu0 0.0
    %522 = vmatpush.msra.mxu0 0.0
    %523 = vmatpush.msra.mxu0 0.0
    %524 = vmatpush.msra.mxu0 %v269
    %525 = vmatpush.msra.mxu0 %v267
    %526 = vmatpush.msra.mxu0 %v265
    %527 = vmatpush.msra.mxu0 %v263
    %528 = vmatpush.msra.mxu0 %v261
    %529 = vmatpush.msra.mxu0 %v259
    %530 = vmatpush.msra.mxu0 %v257
    %531 = vmatpush.msra.mxu0 %v255
    %532 = vmatmul.f32.gmra.mxu0 %v514
    %v533 = vpop.f32.mrf.mxu0
    %v534 = vadd.f32 0.0, %v533
    %535 = vdwg.mxu0
    %536 = vmatpush.msra.mxu0 0.0
    %537 = vmatpush.msra.mxu0 0.0
    %538 = vmatpush.msra.mxu0 0.0
    %539 = vmatpush.msra.mxu0 0.0
    %540 = vmatpush.msra.mxu0 0.0
    %541 = vmatpush.msra.mxu0 0.0
    %542 = vmatpush.msra.mxu0 0.0
    %543 = vmatpush.msra.mxu0 0.0
    %544 = vmatpush.msra.mxu0 %v270
    %545 = vmatpush.msra.mxu0 %v268
    %546 = vmatpush.msra.mxu0 %v266
    %547 = vmatpush.msra.mxu0 %v264
    %548 = vmatpush.msra.mxu0 %v262
    %549 = vmatpush.msra.mxu0 %v260
    %550 = vmatpush.msra.mxu0 %v258
    %551 = vmatpush.msra.mxu0 %v256
    %552 = vmatmul.f32.gmra.mxu0 %v514
    %v553 = vpop.f32.mrf.mxu0
    %v554 = vadd.f32 0.0, %v553
    %555 = vdwg.mxu0
    %v558 = vrot.slane %v534, 2
    %v559 = vrot.slane %v554, 2
    %v562 = vadd.f32 %v508, %v558
    %v563 = vadd.f32 %v509, %v559
    %v564 = vmul.f32 %v562, 0.5
    %v565 = vmul.f32 %v563, 0.5
    %v566 = vsel %vm278, %v562, %v564
    %v567 = vsel %vm279, %v563, %v565
    %v568 = vtanh.pop %v566
    %v569 = vtanh.pop %v567
    %v570 = vmul.f32 %v568, 0.5
    %v571 = vmul.f32 %v569, 0.5
    %v572 = vadd.f32 %v570, 0.5
    %v573 = vadd.f32 %v571, 0.5
    %v574 = vsel %vm278, %v568, %v572
    %v575 = vsel %vm279, %v569, %v573
    %v577 = vrot.slane %v505, 6
    %v579 = vmul.f32 %v574, %v577
    %v580 = vmul.f32 %v574, %v575
    %582 = vrot.lane.b32.xlu0 %v580, 64
    %v583 = vpop.permute.xlu0 %582
    %v585 = vadd.f32 %v579, %v583
    %v586 = vtanh.pop %v585
    %v587 = vmul.f32 %v575, %v586
    %v588 = vld [vmem:[#allocation2 + $0x10] sm:$0x3]
    %v589 = vld [vmem:[#allocation2 + $0x18] sm:$0x3]
    %v591 = vrot.slane %v587, 6
    %592 = vrot.lane.b32.xlu0 %v591, 64
    %v593 = vpop.permute.xlu0 %592
    %v594 = vsel %vm282, %v593, 0
    %596 = vmatpush.msra.mxu0 0.0
    %597 = vmatpush.msra.mxu0 0.0
    %598 = vmatpush.msra.mxu0 0.0
    %599 = vmatpush.msra.mxu0 0.0
    %600 = vmatpush.msra.mxu0 0.0
    %601 = vmatpush.msra.mxu0 0.0
    %602 = vmatpush.msra.mxu0 0.0
    %603 = vmatpush.msra.mxu0 0.0
    %604 = vmatpush.msra.mxu0 %v269
    %605 = vmatpush.msra.mxu0 %v267
    %606 = vmatpush.msra.mxu0 %v265
    %607 = vmatpush.msra.mxu0 %v263
    %608 = vmatpush.msra.mxu0 %v261
    %609 = vmatpush.msra.mxu0 %v259
    %610 = vmatpush.msra.mxu0 %v257
    %611 = vmatpush.msra.mxu0 %v255
    %612 = vmatmul.f32.gmra.mxu0 %v594
    %v613 = vpop.f32.mrf.mxu0
    %v614 = vadd.f32 0.0, %v613
    %615 = vdwg.mxu0
    %616 = vmatpush.msra.mxu0 0.0
    %617 = vmatpush.msra.mxu0 0.0
    %618 = vmatpush.msra.mxu0 0.0
    %619 = vmatpush.msra.mxu0 0.0
    %620 = vmatpush.msra.mxu0 0.0
    %621 = vmatpush.msra.mxu0 0.0
    %622 = vmatpush.msra.mxu0 0.0
    %623 = vmatpush.msra.mxu0 0.0
    %624 = vmatpush.msra.mxu0 %v270
    %625 = vmatpush.msra.mxu0 %v268
    %626 = vmatpush.msra.mxu0 %v266
    %627 = vmatpush.msra.mxu0 %v264
    %628 = vmatpush.msra.mxu0 %v262
    %629 = vmatpush.msra.mxu0 %v260
    %630 = vmatpush.msra.mxu0 %v258
    %631 = vmatpush.msra.mxu0 %v256
    %632 = vmatmul.f32.gmra.mxu0 %v594
    %v633 = vpop.f32.mrf.mxu0
    %v634 = vadd.f32 0.0, %v633
    %635 = vdwg.mxu0
    %v636 = vadd.f32 %v588, %v614
    %v637 = vadd.f32 %v589, %v634
    %v638 = vmul.f32 %v636, 0.5
    %v639 = vmul.f32 %v637, 0.5
    %v640 = vsel %vm278, %v636, %v638
    %v641 = vsel %vm279, %v637, %v639
    %v642 = vtanh.pop %v640
    %v643 = vtanh.pop %v641
    %v644 = vmul.f32 %v642, 0.5
    %v645 = vmul.f32 %v643, 0.5
    %v646 = vadd.f32 %v644, 0.5
    %v647 = vadd.f32 %v645, 0.5
    %v648 = vsel %vm278, %v642, %v646
    %v649 = vsel %vm279, %v643, %v647
    %v651 = vrot.slane %v585, 6
    %v653 = vmul.f32 %v648, %v651
    %v654 = vmul.f32 %v648, %v649
    %656 = vrot.lane.b32.xlu0 %v654, 64
    %v657 = vpop.permute.xlu0 %656
    %v659 = vadd.f32 %v653, %v657
    %v660 = vtanh.pop %v659
    %v661 = vmul.f32 %v649, %v660
    %v662 = vld [vmem:[#allocation2 + $0x10] sm:$0xc]
    %v663 = vld [vmem:[#allocation2 + $0x18] sm:$0xc]
    %665 = vrot.lane.b32.xlu0 %v661, 64
    %v666 = vpop.permute.xlu0 %665
    %v667 = vsel %vm282, %v666, 0
    %669 = vmatpush.msra.mxu0 0.0
    %670 = vmatpush.msra.mxu0 0.0
    %671 = vmatpush.msra.mxu0 0.0
    %672 = vmatpush.msra.mxu0 0.0
    %673 = vmatpush.msra.mxu0 0.0
    %674 = vmatpush.msra.mxu0 0.0
    %675 = vmatpush.msra.mxu0 0.0
    %676 = vmatpush.msra.mxu0 0.0
    %677 = vmatpush.msra.mxu0 %v269
    %678 = vmatpush.msra.mxu0 %v267
    %679 = vmatpush.msra.mxu0 %v265
    %680 = vmatpush.msra.mxu0 %v263
    %681 = vmatpush.msra.mxu0 %v261
    %682 = vmatpush.msra.mxu0 %v259
    %683 = vmatpush.msra.mxu0 %v257
    %684 = vmatpush.msra.mxu0 %v255
    %685 = vmatmul.f32.gmra.mxu0 %v667
    %v686 = vpop.f32.mrf.mxu0
    %v687 = vadd.f32 0.0, %v686
    %688 = vdwg.mxu0
    %689 = vmatpush.msra.mxu0 0.0
    %690 = vmatpush.msra.mxu0 0.0
    %691 = vmatpush.msra.mxu0 0.0
    %692 = vmatpush.msra.mxu0 0.0
    %693 = vmatpush.msra.mxu0 0.0
    %694 = vmatpush.msra.mxu0 0.0
    %695 = vmatpush.msra.mxu0 0.0
    %696 = vmatpush.msra.mxu0 0.0
    %697 = vmatpush.msra.mxu0 %v270
    %698 = vmatpush.msra.mxu0 %v268
    %699 = vmatpush.msra.mxu0 %v266
    %700 = vmatpush.msra.mxu0 %v264
    %701 = vmatpush.msra.mxu0 %v262
    %702 = vmatpush.msra.mxu0 %v260
    %703 = vmatpush.msra.mxu0 %v258
    %704 = vmatpush.msra.mxu0 %v256
    %705 = vmatmul.f32.gmra.mxu0 %v667
    %v706 = vpop.f32.mrf.mxu0
    %v707 = vadd.f32 0.0, %v706
    %708 = vdwg.mxu0
    %v711 = vrot.slane %v687, 6
    %v712 = vrot.slane %v707, 6
    %v715 = vadd.f32 %v662, %v711
    %v716 = vadd.f32 %v663, %v712
    %v717 = vmul.f32 %v715, 0.5
    %v718 = vmul.f32 %v716, 0.5
    %v719 = vsel %vm278, %v715, %v717
    %v720 = vsel %vm279, %v716, %v718
    %v721 = vtanh.pop %v719
    %v722 = vtanh.pop %v720
    %v723 = vmul.f32 %v721, 0.5
    %v724 = vmul.f32 %v722, 0.5
    %v725 = vadd.f32 %v723, 0.5
    %v726 = vadd.f32 %v724, 0.5
    %v727 = vsel %vm278, %v721, %v725
    %v728 = vsel %vm279, %v722, %v726
    %v730 = vrot.slane %v659, 6
    %v732 = vmul.f32 %v727, %v730
    %v733 = vmul.f32 %v727, %v728
    %735 = vrot.lane.b32.xlu0 %v733, 64
    %v736 = vpop.permute.xlu0 %735
    %v738 = vadd.f32 %v732, %v736
    %v739 = vtanh.pop %v738
    %v740 = vmul.f32 %v728, %v739
    %v741 = vld [vmem:[#allocation2 + $0x10] sm:$0x30]
    %v742 = vld [vmem:[#allocation2 + $0x18] sm:$0x30]
    %v744 = vrot.slane %v740, 2
    %745 = vrot.lane.b32.xlu0 %v744, 64
    %v746 = vpop.permute.xlu0 %745
    %v747 = vsel %vm282, %v746, 0
    %749 = vmatpush.msra.mxu0 0.0
    %750 = vmatpush.msra.mxu0 0.0
    %751 = vmatpush.msra.mxu0 0.0
    %752 = vmatpush.msra.mxu0 0.0
    %753 = vmatpush.msra.mxu0 0.0
    %754 = vmatpush.msra.mxu0 0.0
    %755 = vmatpush.msra.mxu0 0.0
    %756 = vmatpush.msra.mxu0 0.0
    %757 = vmatpush.msra.mxu0 %v269
    %758 = vmatpush.msra.mxu0 %v267
    %759 = vmatpush.msra.mxu0 %v265
    %760 = vmatpush.msra.mxu0 %v263
    %761 = vmatpush.msra.mxu0 %v261
    %762 = vmatpush.msra.mxu0 %v259
    %763 = vmatpush.msra.mxu0 %v257
    %764 = vmatpush.msra.mxu0 %v255
    %765 = vmatmul.f32.gmra.mxu0 %v747
    %v766 = vpop.f32.mrf.mxu0
    %v767 = vadd.f32 0.0, %v766
    %768 = vdwg.mxu0
    %769 = vmatpush.msra.mxu0 0.0
    %770 = vmatpush.msra.mxu0 0.0
    %771 = vmatpush.msra.mxu0 0.0
    %772 = vmatpush.msra.mxu0 0.0
    %773 = vmatpush.msra.mxu0 0.0
    %774 = vmatpush.msra.mxu0 0.0
    %775 = vmatpush.msra.mxu0 0.0
    %776 = vmatpush.msra.mxu0 0.0
    %777 = vmatpush.msra.mxu0 %v270
    %778 = vmatpush.msra.mxu0 %v268
    %779 = vmatpush.msra.mxu0 %v266
    %780 = vmatpush.msra.mxu0 %v264
    %781 = vmatpush.msra.mxu0 %v262
    %782 = vmatpush.msra.mxu0 %v260
    %783 = vmatpush.msra.mxu0 %v258
    %784 = vmatpush.msra.mxu0 %v256
    %785 = vmatmul.f32.gmra.mxu0 %v747
    %v786 = vpop.f32.mrf.mxu0
    %v787 = vadd.f32 0.0, %v786
    %788 = vdwg.mxu0
    %v791 = vrot.slane %v767, 4
    %v792 = vrot.slane %v787, 4
    %v795 = vadd.f32 %v741, %v791
    %v796 = vadd.f32 %v742, %v792
    %v797 = vmul.f32 %v795, 0.5
    %v798 = vmul.f32 %v796, 0.5
    %v799 = vsel %vm278, %v795, %v797
    %v800 = vsel %vm279, %v796, %v798
    %v801 = vtanh.pop %v799
    %v802 = vtanh.pop %v800
    %v803 = vmul.f32 %v801, 0.5
    %v804 = vmul.f32 %v802, 0.5
    %v805 = vadd.f32 %v803, 0.5
    %v806 = vadd.f32 %v804, 0.5
    %v807 = vsel %vm278, %v801, %v805
    %v808 = vsel %vm279, %v802, %v806
    %v810 = vrot.slane %v738, 6
    %v812 = vmul.f32 %v807, %v810
    %v813 = vmul.f32 %v807, %v808
    %815 = vrot.lane.b32.xlu0 %v813, 64
    %v816 = vpop.permute.xlu0 %815
    %v818 = vadd.f32 %v812, %v816
    %v819 = vtanh.pop %v818
    %v820 = vmul.f32 %v808, %v819
    %v821 = vld [vmem:[#allocation2 + $0x10] sm:$0xc0]
    %v822 = vld [vmem:[#allocation2 + $0x18] sm:$0xc0]
    %v824 = vrot.slane %v820, 4
    %825 = vrot.lane.b32.xlu0 %v824, 64
    %v826 = vpop.permute.xlu0 %825
    %v827 = vsel %vm282, %v826, 0
    %829 = vmatpush.msra.mxu0 0.0
    %830 = vmatpush.msra.mxu0 0.0
    %831 = vmatpush.msra.mxu0 0.0
    %832 = vmatpush.msra.mxu0 0.0
    %833 = vmatpush.msra.mxu0 0.0
    %834 = vmatpush.msra.mxu0 0.0
    %835 = vmatpush.msra.mxu0 0.0
    %836 = vmatpush.msra.mxu0 0.0
    %837 = vmatpush.msra.mxu0 %v269
    %838 = vmatpush.msra.mxu0 %v267
    %839 = vmatpush.msra.mxu0 %v265
    %840 = vmatpush.msra.mxu0 %v263
    %841 = vmatpush.msra.mxu0 %v261
    %842 = vmatpush.msra.mxu0 %v259
    %843 = vmatpush.msra.mxu0 %v257
    %844 = vmatpush.msra.mxu0 %v255
    %845 = vmatmul.f32.gmra.mxu0 %v827
    %v846 = vpop.f32.mrf.mxu0
    %v847 = vadd.f32 0.0, %v846
    %848 = vdwg.mxu0
    %849 = vmatpush.msra.mxu0 0.0
    %850 = vmatpush.msra.mxu0 0.0
    %851 = vmatpush.msra.mxu0 0.0
    %852 = vmatpush.msra.mxu0 0.0
    %853 = vmatpush.msra.mxu0 0.0
    %854 = vmatpush.msra.mxu0 0.0
    %855 = vmatpush.msra.mxu0 0.0
    %856 = vmatpush.msra.mxu0 0.0
    %857 = vmatpush.msra.mxu0 %v270
    %858 = vmatpush.msra.mxu0 %v268
    %859 = vmatpush.msra.mxu0 %v266
    %860 = vmatpush.msra.mxu0 %v264
    %861 = vmatpush.msra.mxu0 %v262
    %862 = vmatpush.msra.mxu0 %v260
    %863 = vmatpush.msra.mxu0 %v258
    %864 = vmatpush.msra.mxu0 %v256
    %865 = vmatmul.f32.gmra.mxu0 %v827
    %v866 = vpop.f32.mrf.mxu0
    %v867 = vadd.f32 0.0, %v866
    %868 = vdwg.mxu0
    %v871 = vrot.slane %v847, 2
    %v872 = vrot.slane %v867, 2
    %v875 = vadd.f32 %v821, %v871
    %v876 = vadd.f32 %v822, %v872
    %v877 = vmul.f32 %v875, 0.5
    %v878 = vmul.f32 %v876, 0.5
    %v879 = vsel %vm278, %v875, %v877
    %v880 = vsel %vm279, %v876, %v878
    %v881 = vtanh.pop %v879
    %v882 = vtanh.pop %v880
    %v883 = vmul.f32 %v881, 0.5
    %v884 = vmul.f32 %v882, 0.5
    %v885 = vadd.f32 %v883, 0.5
    %v886 = vadd.f32 %v884, 0.5
    %v887 = vsel %vm278, %v881, %v885
    %v888 = vsel %vm279, %v882, %v886
    %v890 = vrot.slane %v818, 6
    %v892 = vmul.f32 %v887, %v890
    %v893 = vmul.f32 %v887, %v888
    %895 = vrot.lane.b32.xlu0 %v893, 64
    %v896 = vpop.permute.xlu0 %895
    %v898 = vadd.f32 %v892, %v896
    %v899 = vtanh.pop %v898
    %v900 = vmul.f32 %v888, %v899
    %v901 = vld [vmem:[%s7] sm:$0xff]
    %v902 = vld [vmem:[%s7 + $0x8] sm:$0xff]
    %v903 = vld [vmem:[%s7 + $0x10] sm:$0xff]
    %v904 = vld [vmem:[%s7 + $0x18] sm:$0xff]
    %v905 = vld [vmem:[%s7 + $0x20] sm:$0xff]
    %v906 = vld [vmem:[%s7 + $0x28] sm:$0xff]
    %v907 = vld [vmem:[%s7 + $0x30] sm:$0xff]
    %v908 = vld [vmem:[%s7 + $0x38] sm:$0xff]
    %v909 = vld [vmem:[#allocation8] sm:$0x3]
    %v910 = vld [vmem:[#allocation11] sm:$0xff]
    %vm911 = vcmask 64512
    %v913 = vsel %vm911, %v909, 0
    %915 = vmatpush.msra.mxu0 0.0
    %916 = vmatpush.msra.mxu0 0.0
    %917 = vmatpush.msra.mxu0 0.0
    %918 = vmatpush.msra.mxu0 0.0
    %919 = vmatpush.msra.mxu0 0.0
    %920 = vmatpush.msra.mxu0 0.0
    %921 = vmatpush.msra.mxu0 0.0
    %922 = vmatpush.msra.mxu0 0.0
    %923 = vmatpush.msra.mxu0 0.0
    %924 = vmatpush.msra.mxu0 0.0
    %925 = vmatpush.msra.mxu0 0.0
    %926 = vmatpush.msra.mxu0 0.0
    %927 = vmatpush.msra.mxu0 0.0
    %928 = vmatpush.msra.mxu0 0.0
    %929 = vmatpush.msra.mxu0 0.0
    %930 = vmatpush.msra.mxu0 %v910
    %931 = vmatmul.f32.gmra.mxu0 %v913
    %v932 = vpop.f32.mrf.mxu0
    %v933 = vadd.f32 0.0, %v932
    %934 = vdwg.mxu0
    %v936 = vrot.slane %v900, 6
    %937 = vrot.lane.b32.xlu0 %v936, 64
    %v938 = vpop.permute.xlu0 %937
    %v939 = vsel %vm282, %v938, 0
    %941 = vmatpush.msra.mxu0 0.0
    %942 = vmatpush.msra.mxu0 0.0
    %943 = vmatpush.msra.mxu0 0.0
    %944 = vmatpush.msra.mxu0 0.0
    %945 = vmatpush.msra.mxu0 0.0
    %946 = vmatpush.msra.mxu0 0.0
    %947 = vmatpush.msra.mxu0 0.0
    %948 = vmatpush.msra.mxu0 0.0
    %949 = vmatpush.msra.mxu0 %v908
    %950 = vmatpush.msra.mxu0 %v907
    %951 = vmatpush.msra.mxu0 %v906
    %952 = vmatpush.msra.mxu0 %v905
    %953 = vmatpush.msra.mxu0 %v904
    %954 = vmatpush.msra.mxu0 %v903
    %955 = vmatpush.msra.mxu0 %v902
    %956 = vmatpush.msra.mxu0 %v901
    %957 = vmatmul.f32.gmra.mxu0 %v939
    %v958 = vpop.f32.mrf.mxu0
    %v959 = vadd.f32 %v933, %v958
    %960 = vdwg.mxu0
    %v961 = vld [vmem:[%s9] sm:$0x1]
    %v963 = vperm.slane %v961, 0
    %v965 = vadd.f32 %v959, %v963
    %v966 = vmax.f32 %v965, 0.0
    %v967 = vld [vmem:[%s10] sm:$0xff]
    %v968 = vld [vmem:[%s10 + $0x8] sm:$0xff]
    %v969 = vld [vmem:[%s10 + $0x10] sm:$0xff]
    %v970 = vld [vmem:[%s10 + $0x18] sm:$0xff]
    %v971 = vld [vmem:[%s11] sm:$0x1]
    %v973 = vperm.slane %v971, 0
    %vm975 = vcmask 261120
    %v977 = vsel %vm975, %v966, 0
    %979 = vmatpush.msra.mxu0 0.0
    %980 = vmatpush.msra.mxu0 0.0
    %981 = vmatpush.msra.mxu0 0.0
    %982 = vmatpush.msra.mxu0 0.0
    %983 = vmatpush.msra.mxu0 0.0
    %984 = vmatpush.msra.mxu0 0.0
    %985 = vmatpush.msra.mxu0 0.0
    %986 = vmatpush.msra.mxu0 0.0
    %987 = vmatpush.msra.mxu0 0.0
    %988 = vmatpush.msra.mxu0 0.0
    %989 = vmatpush.msra.mxu0 0.0
    %990 = vmatpush.msra.mxu0 0.0
    %991 = vmatpush.msra.mxu0 %v970
    %992 = vmatpush.msra.mxu0 %v969
    %993 = vmatpush.msra.mxu0 %v968
    %994 = vmatpush.msra.mxu0 %v967
    %995 = vmatmul.f32.gmra.mxu0 %v977
    %v996 = vpop.f32.mrf.mxu0
    %v997 = vadd.f32 %v973, %v996
    %998 = vdwg.mxu0
    %999 = vst [vmem:[#allocation12] sm:$0x3] %v997
    // Predicated region
    $region70: #{tpu_custom_call.1} parent=1 // pred_check
      _
    $region71: #{tpu_custom_call.1} parent=1 // pred_check_branch
      %1001 = sbr.rel (0) target = $region73
    $region72: #{tpu_custom_call.1} parent=1 // pred_region
      %1003 = vsyncadd [#allocation5], 0
      %s1005 = sshll.u32 [#allocation12], 4
      %s1006 = int_to_ptr.vmem [resolvable:$true] %s1005
      %s1007 = sshll.u32 %s12, 4
      %s1008 = int_to_ptr.hbm [resolvable:$true] %s1007
      %1010 = dma.vmem_to_hbm [thread:$0]  %s1006, 32, %s1008, [#allocation5]
    $region73: #{tpu_custom_call.1} parent=1 // pred_fallthru
      _
    // Predicated region
    $region74: #{tpu_custom_call.1} parent=1 // pred_check
      _
    $region75: #{tpu_custom_call.1} parent=1 // pred_check_branch
      %1012 = sbr.rel (0) target = $region77
    $region76: #{tpu_custom_call.1} parent=1 // pred_region
      %1014 = dma.done [#allocation5], 32
    $region77: #{tpu_custom_call.1} parent=1 // pred_fallthru
      _
    %1015 = vsyncpa [#allocation4], 1
    %1016 = vsyncpa [#allocation7], 1
    %1017 = vsyncpa [#allocation10], 1
    %1018 = vsyncpa [#allocation5], 1

</llo_original>
